<compile_context>
chip_gen: v5e
topology: v5e:2x2
jax: 0.10.0
libtpu: 0.0.40
codegen_flags: <defaults>
</compile_context>

<pallas_src>
import functools
from typing import Optional, Tuple, Union

import jax
import jax.numpy as jnp
import numpy as np
from jax.experimental import pallas as pl
from jax.experimental.pallas import tpu as pltpu

IntOrPair = Union[int, Tuple[int, int]]


def force_pair(v: IntOrPair) -> Tuple[int, int]:
    if isinstance(v, tuple):
        if len(v) != 2:
            raise ValueError(v)
        return (int(v[0]), int(v[1]))
    elif isinstance(v, int):
        return (v, v)
    raise ValueError(v)


def _cdiv(a: int, b: int) -> int:
    return -(-a // b)


def _maxpool_kernel(x_ref, o_ref, *, kh, kw, sy, sx):
    """Pool one (Hpp, Wpp, TG, 128) block into (OH, OW, TG, 128).

    All window selection uses unit-stride slices and reshapes that only touch
    the two leading (untiled) axes, so everything stays on the VPU with fully
    lane-dense vregs and no scratch / transposes.
    """
    oh, ow, tg, lanes = o_ref.shape
    v = x_ref[...]                                    # (hpp, wpp, tg, lanes)
    wpp = v.shape[1]

    # ---- max over the kernel's H extent: rows dh + oy*sy --------------------
    rowmax = None
    for dh in range(kh):
        s = v[dh:dh + oh * sy]                        # (oh*sy, wpp, tg, lanes)
        if sy > 1:
            # keep every sy-th row: merge/split leading axes, then unit-stride slice
            s = s.reshape(oh, sy * wpp, tg, lanes)[:, :wpp]
        rowmax = s if rowmax is None else jnp.maximum(rowmax, s)

    # ---- max over the kernel's W extent: cols dw + ox*sx --------------------
    out = None
    for dw in range(kw):
        s = rowmax[:, dw:dw + ow * sx]                # (oh, ow*sx, tg, lanes)
        if sx > 1:
            s = s.reshape(oh * ow, sx, tg, lanes)[:, 0]
            s = s.reshape(oh, ow, tg, lanes)
        out = s if out is None else jnp.maximum(out, s)

    o_ref[...] = out


@functools.partial(jax.jit, static_argnums=(1, 2, 3))
def maxpool2d_pallas(x: jax.Array,
                     kernel_size: IntOrPair,
                     stride: Optional[IntOrPair] = None,
                     padding: IntOrPair = 1) -> jax.Array:
    """Pallas TPU implementation of MaxPool2d.forward (NCHW in / NCHW out)."""
    kh, kw = force_pair(kernel_size)
    sy, sx = force_pair(stride if stride is not None else kernel_size)
    py, px = force_pair(padding)

    if not jnp.issubdtype(x.dtype, jnp.floating):
        # -inf padding (matching the reference module) needs a float dtype.
        raise ValueError("maxpool2d_pallas requires a floating dtype input.")

    b, c, h, w = x.shape
    hp, wp = h + 2 * py, w + 2 * px
    if hp < kh or wp < kw:
        raise ValueError("kernel size larger than padded input")
    oh = 1 + (hp - kh) // sy
    ow = 1 + (wp - kw) // sx

    # Spatial extents actually read by the kernel (the stride-select reshape
    # trick may need up to stride-1 extra -inf rows/cols past `hp`/`wp`).
    hpp = oh * sy + kh - 1
    wpp = ow * sx + kw - 1

    lanes = 128
    bc = b * c
    g = _cdiv(bc, lanes)

    # Channel-group tile per grid step. Keep the second-minor block dim either
    # equal to the full axis or a multiple of the native sublane tiling.
    itemsize = jnp.dtype(x.dtype).itemsize
    sub = max(8, 32 // itemsize)                      # 8 for f32, 16 for bf16
    budget = 20 * 1024 * 1024                         # double-buffered in+out blocks
    per_group = (hpp * wpp + oh * ow) * lanes * itemsize * 2
    if g <= sub:
        tg = g
    else:
        tg = sub * max(1, min(budget // (per_group * sub), _cdiv(g, sub)))
    gp = _cdiv(g, tg) * tg
    bcp = gp * lanes
    # TODO(synk): very large H*W planes would additionally need H-tiling with
    # halo regions; not required for the shapes this module is used with.

    # Single re-layout pass: NCHW -> (H, W, BC), -inf spatial padding and the
    # channel axis padded up to gp*128 lanes, all fused into one XLA copy.
    xt = x.reshape(bc, h, w).transpose(1, 2, 0)
    xt = jnp.pad(
        xt,
        ((py, hpp - h - py), (px, wpp - w - px), (0, bcp - bc)),
        constant_values=-jnp.inf,
    )
    xt = xt.reshape(hpp, wpp, gp, lanes)

    kernel = functools.partial(_maxpool_kernel, kh=kh, kw=kw, sy=sy, sx=sx)

    out = pl.pallas_call(
        kernel,
        out_shape=jax.ShapeDtypeStruct((oh, ow, gp, lanes), x.dtype),
        grid_spec=pltpu.PrefetchScalarGridSpec(
            num_scalar_prefetch=0,
            grid=(gp // tg,),
            in_specs=[pl.BlockSpec((hpp, wpp, tg, lanes), lambda i: (0, 0, i, 0))],
            out_specs=pl.BlockSpec((oh, ow, tg, lanes), lambda i: (0, 0, i, 0)),
        ),
        compiler_params=pltpu.CompilerParams(
            dimension_semantics=("parallel",),
            vmem_limit_bytes=32 * 1024 * 1024,
        ),
        cost_estimate=pl.CostEstimate(
            flops=kh * kw * oh * ow * bcp,
            transcendentals=0,
            bytes_accessed=(hpp * wpp + oh * ow) * bcp * itemsize,
        ),
    )(xt)

    out = out.reshape(oh, ow, bcp)[:, :, :bc]
    return out.transpose(2, 0, 1).reshape(b, c, oh, ow)


class MaxPool2d:
    """Mirror of the PyTorch module (no parameters)."""

    def __init__(self, kernel_size: IntOrPair,
                 stride: Optional[IntOrPair] = None,
                 padding: IntOrPair = 1):
        self.kernel_size = kernel_size
        self.stride = stride
        self.padding = padding

    def __call__(self, x: jax.Array) -> jax.Array:
        return maxpool2d_pallas(x, self.kernel_size, self.stride, self.padding)


if __name__ == "__main__":
    key = jax.random.PRNGKey(0)
    x = jax.random.normal(key, (2, 4, 16, 16), dtype=jnp.float32)

    # config 1: the standard course config (k=3, s=2, p=1)
    pool = MaxPool2d(kernel_size=3, stride=2, padding=1)
    out = jax.block_until_ready(pool(x))
    ref = jax.lax.reduce_window(
        x, -jnp.inf, jax.lax.max,
        window_dimensions=(1, 1, 3, 3),
        window_strides=(1, 1, 2, 2),
        padding=((0, 0), (0, 0), (1, 1), (1, 1)),
    )
    np.testing.assert_allclose(np.asarray(out), np.asarray(ref), rtol=0, atol=0)

    # config 2: asymmetric kernel/stride/padding (exercises the stride==1 path)
    pool2 = MaxPool2d(kernel_size=(2, 3), stride=(1, 2), padding=(0, 1))
    out2 = jax.block_until_ready(pool2(x))
    ref2 = jax.lax.reduce_window(
        x, -jnp.inf, jax.lax.max,
        window_dimensions=(1, 1, 2, 3),
        window_strides=(1, 1, 1, 2),
        padding=((0, 0), (0, 0), (0, 0), (1, 1)),
    )
    np.testing.assert_allclose(np.asarray(out2), np.asarray(ref2), rtol=0, atol=0)

    print("KERNEL_OK")
</pallas_src>

<mosaic_0001>
module attributes {stable_mosaic.version = 11 : i64} {
  func.func @_maxpool_kernel(%arg0: i32, %arg1: memref<18x18x1x128xf32, #tpu.memory_space<vmem>>, %arg2: memref<8x8x1x128xf32, #tpu.memory_space<vmem>>) attributes {dimension_semantics = [#tpu.dimension_semantics<parallel>], iteration_bounds = array<i64: 1>, scalar_prefetch = 0 : i64, scratch_operands = 0 : i64, tpu.core_type = #tpu.core_type<tc>, window_params = [{transform_indices = @transform_0, window_bounds = array<i64: 18, 18, 1, 128>}, {transform_indices = @transform_1, window_bounds = array<i64: 8, 8, 1, 128>}]} {
    %c0 = arith.constant 0 : index
    %c0_0 = arith.constant 0 : index
    %c0_1 = arith.constant 0 : index
    %c0_2 = arith.constant 0 : index
    %0 = vector.load %arg1[%c0, %c0_0, %c0_1, %c0_2] : memref<18x18x1x128xf32, #tpu.memory_space<vmem>>, vector<18x18x1x128xf32>
    %1 = vector.extract_strided_slice %0 {offsets = [0, 0, 0, 0], sizes = [16, 18, 1, 128], strides = [1, 1, 1, 1]} : vector<18x18x1x128xf32> to vector<16x18x1x128xf32>
    %2 = vector.shape_cast %1 : vector<16x18x1x128xf32> to vector<8x36x1x128xf32>
    %3 = vector.extract_strided_slice %2 {offsets = [0, 0, 0, 0], sizes = [8, 18, 1, 128], strides = [1, 1, 1, 1]} : vector<8x36x1x128xf32> to vector<8x18x1x128xf32>
    %4 = vector.extract_strided_slice %0 {offsets = [1, 0, 0, 0], sizes = [16, 18, 1, 128], strides = [1, 1, 1, 1]} : vector<18x18x1x128xf32> to vector<16x18x1x128xf32>
    %5 = vector.shape_cast %4 : vector<16x18x1x128xf32> to vector<8x36x1x128xf32>
    %6 = vector.extract_strided_slice %5 {offsets = [0, 0, 0, 0], sizes = [8, 18, 1, 128], strides = [1, 1, 1, 1]} : vector<8x36x1x128xf32> to vector<8x18x1x128xf32>
    %7 = arith.maximumf %3, %6 : vector<8x18x1x128xf32>
    %8 = vector.extract_strided_slice %0 {offsets = [2, 0, 0, 0], sizes = [16, 18, 1, 128], strides = [1, 1, 1, 1]} : vector<18x18x1x128xf32> to vector<16x18x1x128xf32>
    %9 = vector.shape_cast %8 : vector<16x18x1x128xf32> to vector<8x36x1x128xf32>
    %10 = vector.extract_strided_slice %9 {offsets = [0, 0, 0, 0], sizes = [8, 18, 1, 128], strides = [1, 1, 1, 1]} : vector<8x36x1x128xf32> to vector<8x18x1x128xf32>
    %11 = arith.maximumf %7, %10 : vector<8x18x1x128xf32>
    %12 = vector.extract_strided_slice %11 {offsets = [0, 0, 0, 0], sizes = [8, 16, 1, 128], strides = [1, 1, 1, 1]} : vector<8x18x1x128xf32> to vector<8x16x1x128xf32>
    %13 = vector.shape_cast %12 : vector<8x16x1x128xf32> to vector<64x2x1x128xf32>
    %14 = vector.extract_strided_slice %13 {offsets = [0, 0, 0, 0], sizes = [64, 1, 1, 128], strides = [1, 1, 1, 1]} : vector<64x2x1x128xf32> to vector<64x1x1x128xf32>
    %15 = vector.shape_cast %14 : vector<64x1x1x128xf32> to vector<64x1x128xf32>
    %16 = vector.shape_cast %15 : vector<64x1x128xf32> to vector<8x8x1x128xf32>
    %17 = vector.extract_strided_slice %11 {offsets = [0, 1, 0, 0], sizes = [8, 16, 1, 128], strides = [1, 1, 1, 1]} : vector<8x18x1x128xf32> to vector<8x16x1x128xf32>
    %18 = vector.shape_cast %17 : vector<8x16x1x128xf32> to vector<64x2x1x128xf32>
    %19 = vector.extract_strided_slice %18 {offsets = [0, 0, 0, 0], sizes = [64, 1, 1, 128], strides = [1, 1, 1, 1]} : vector<64x2x1x128xf32> to vector<64x1x1x128xf32>
    %20 = vector.shape_cast %19 : vector<64x1x1x128xf32> to vector<64x1x128xf32>
    %21 = vector.shape_cast %20 : vector<64x1x128xf32> to vector<8x8x1x128xf32>
    %22 = arith.maximumf %16, %21 : vector<8x8x1x128xf32>
    %23 = vector.extract_strided_slice %11 {offsets = [0, 2, 0, 0], sizes = [8, 16, 1, 128], strides = [1, 1, 1, 1]} : vector<8x18x1x128xf32> to vector<8x16x1x128xf32>
    %24 = vector.shape_cast %23 : vector<8x16x1x128xf32> to vector<64x2x1x128xf32>
    %25 = vector.extract_strided_slice %24 {offsets = [0, 0, 0, 0], sizes = [64, 1, 1, 128], strides = [1, 1, 1, 1]} : vector<64x2x1x128xf32> to vector<64x1x1x128xf32>
    %26 = vector.shape_cast %25 : vector<64x1x1x128xf32> to vector<64x1x128xf32>
    %27 = vector.shape_cast %26 : vector<64x1x128xf32> to vector<8x8x1x128xf32>
    %28 = arith.maximumf %22, %27 : vector<8x8x1x128xf32>
    %c0_3 = arith.constant 0 : index
    %c0_4 = arith.constant 0 : index
    %c0_5 = arith.constant 0 : index
    %c0_6 = arith.constant 0 : index
    %29 = vector.load %arg2[%c0_3, %c0_4, %c0_5, %c0_6] : memref<8x8x1x128xf32, #tpu.memory_space<vmem>>, vector<8x8x1x128xf32>
    tpu.vector_store %arg2[%c0_3, %c0_4, %c0_5, %c0_6], %28 {strides = array<i32>} : memref<8x8x1x128xf32, #tpu.memory_space<vmem>>, vector<8x8x1x128xf32>,
    return
  }
  func.func @transform_0(%arg0: i32) -> (i32, i32, i32, i32) {
    %c0_i32 = arith.constant 0 : i32
    %c0_i32_0 = arith.constant 0 : i32
    %c0_i32_1 = arith.constant 0 : i32
    %c0_i32_2 = arith.constant 0 : i32
    return %c0_i32, %c0_i32_0, %arg0, %c0_i32_1 : i32, i32, i32, i32
  }
  func.func @transform_1(%arg0: i32) -> (i32, i32, i32, i32) {
    %c0_i32 = arith.constant 0 : i32
    %c0_i32_0 = arith.constant 0 : i32
    %c0_i32_1 = arith.constant 0 : i32
    %c0_i32_2 = arith.constant 0 : i32
    return %c0_i32, %c0_i32_0, %arg0, %c0_i32_1 : i32, i32, i32, i32
  }
}

</mosaic_0001>

<llo_original>
// kernel: maxpool2d_pallas.1
$region0: #{maxpool2d_pallas.1}
  #allocation0 [shape = 'u32[]', space=smem, size = 0x4, offset = 0x4, fixed_abs, tag = 'smem constant byte address 0x4 - core index']
  #allocation1 [shape = 'u32[72,128]{1,0:T(1,128)}', space=vmem, size = 0x9000, scoped, tag = 'internal scratch']
  %s0 = inlined_call_operand.vmem [shape: f32[18,18,1,128], index: 0, kind: input, shape index: {}]
  %s1 = inlined_call_operand.vmem [shape: f32[8,8,1,128], index: 1, kind: output, shape index: {}]
  %s2 = sld [smem:[#allocation0]]
  $region14: #{maxpool2d_pallas.1} parent=0
    _
  %s4 = ssub.s32 1, %s2
  %s5 = scalar_select 0, %s4, %s2
  // Predicated region
  $region2: #{maxpool2d_pallas.1} parent=0 // pred_check
    _
  $region3: #{maxpool2d_pallas.1} parent=0 // pred_check_branch
    %7 = sbr.rel (0) target = $region5
  $region4: #{maxpool2d_pallas.1} parent=0 // pred_region
    _
  $region5: #{maxpool2d_pallas.1} parent=0 // pred_fallthru
    _
  %v8 = vld [vmem:[%s0] sm:$0x1]
  %v9 = vld [vmem:[%s0 + $0x1] sm:$0x1]
  %v10 = vld [vmem:[%s0 + $0x2] sm:$0x1]
  %v11 = vld [vmem:[%s0 + $0x3] sm:$0x1]
  %v12 = vld [vmem:[%s0 + $0x4] sm:$0x1]
  %v13 = vld [vmem:[%s0 + $0x5] sm:$0x1]
  %v14 = vld [vmem:[%s0 + $0x6] sm:$0x1]
  %v15 = vld [vmem:[%s0 + $0x7] sm:$0x1]
  %v16 = vld [vmem:[%s0 + $0x8] sm:$0x1]
  %v17 = vld [vmem:[%s0 + $0x9] sm:$0x1]
  %v18 = vld [vmem:[%s0 + $0xa] sm:$0x1]
  %v19 = vld [vmem:[%s0 + $0xb] sm:$0x1]
  %v20 = vld [vmem:[%s0 + $0xc] sm:$0x1]
  %v21 = vld [vmem:[%s0 + $0xd] sm:$0x1]
  %v22 = vld [vmem:[%s0 + $0xe] sm:$0x1]
  %v23 = vld [vmem:[%s0 + $0xf] sm:$0x1]
  %v24 = vld [vmem:[%s0 + $0x10] sm:$0x1]
  %v25 = vld [vmem:[%s0 + $0x12] sm:$0x1]
  %v26 = vld [vmem:[%s0 + $0x13] sm:$0x1]
  %v27 = vld [vmem:[%s0 + $0x14] sm:$0x1]
  %v28 = vld [vmem:[%s0 + $0x15] sm:$0x1]
  %v29 = vld [vmem:[%s0 + $0x16] sm:$0x1]
  %v30 = vld [vmem:[%s0 + $0x17] sm:$0x1]
  %v31 = vld [vmem:[%s0 + $0x18] sm:$0x1]
  %v32 = vld [vmem:[%s0 + $0x19] sm:$0x1]
  %v33 = vld [vmem:[%s0 + $0x1a] sm:$0x1]
  %v34 = vld [vmem:[%s0 + $0x1b] sm:$0x1]
  %v35 = vld [vmem:[%s0 + $0x1c] sm:$0x1]
  %v36 = vld [vmem:[%s0 + $0x1d] sm:$0x1]
  %v37 = vld [vmem:[%s0 + $0x1e] sm:$0x1]
  %v38 = vld [vmem:[%s0 + $0x1f] sm:$0x1]
  %v39 = vld [vmem:[%s0 + $0x20] sm:$0x1]
  %v40 = vld [vmem:[%s0 + $0x21] sm:$0x1]
  %v41 = vld [vmem:[%s0 + $0x22] sm:$0x1]
  %v42 = vld [vmem:[%s0 + $0x24] sm:$0x1]
  %v43 = vld [vmem:[%s0 + $0x25] sm:$0x1]
  %v44 = vld [vmem:[%s0 + $0x26] sm:$0x1]
  %v45 = vld [vmem:[%s0 + $0x27] sm:$0x1]
  %v46 = vld [vmem:[%s0 + $0x28] sm:$0x1]
  %v47 = vld [vmem:[%s0 + $0x29] sm:$0x1]
  %v48 = vld [vmem:[%s0 + $0x2a] sm:$0x1]
  %v49 = vld [vmem:[%s0 + $0x2b] sm:$0x1]
  %v50 = vld [vmem:[%s0 + $0x2c] sm:$0x1]
  %v51 = vld [vmem:[%s0 + $0x2d] sm:$0x1]
  %v52 = vld [vmem:[%s0 + $0x2e] sm:$0x1]
  %v53 = vld [vmem:[%s0 + $0x2f] sm:$0x1]
  %v54 = vld [vmem:[%s0 + $0x30] sm:$0x1]
  %v55 = vld [vmem:[%s0 + $0x31] sm:$0x1]
  %v56 = vld [vmem:[%s0 + $0x32] sm:$0x1]
  %v57 = vld [vmem:[%s0 + $0x33] sm:$0x1]
  %v58 = vld [vmem:[%s0 + $0x34] sm:$0x1]
  %v59 = vld [vmem:[%s0 + $0x36] sm:$0x1]
  %v60 = vld [vmem:[%s0 + $0x37] sm:$0x1]
  %v61 = vld [vmem:[%s0 + $0x38] sm:$0x1]
  %v62 = vld [vmem:[%s0 + $0x39] sm:$0x1]
  %v63 = vld [vmem:[%s0 + $0x3a] sm:$0x1]
  %v64 = vld [vmem:[%s0 + $0x3b] sm:$0x1]
  %v65 = vld [vmem:[%s0 + $0x3c] sm:$0x1]
  %v66 = vld [vmem:[%s0 + $0x3d] sm:$0x1]
  %v67 = vld [vmem:[%s0 + $0x3e] sm:$0x1]
  %v68 = vld [vmem:[%s0 + $0x3f] sm:$0x1]
  %v69 = vld [vmem:[%s0 + $0x40] sm:$0x1]
  %v70 = vld [vmem:[%s0 + $0x41] sm:$0x1]
  %v71 = vld [vmem:[%s0 + $0x42] sm:$0x1]
  %v72 = vld [vmem:[%s0 + $0x43] sm:$0x1]
  %v73 = vld [vmem:[%s0 + $0x44] sm:$0x1]
  %v74 = vld [vmem:[%s0 + $0x45] sm:$0x1]
  %v75 = vld [vmem:[%s0 + $0x46] sm:$0x1]
  %v76 = vld [vmem:[%s0 + $0x48] sm:$0x1]
  %v77 = vld [vmem:[%s0 + $0x49] sm:$0x1]
  %v78 = vld [vmem:[%s0 + $0x4a] sm:$0x1]
  %v79 = vld [vmem:[%s0 + $0x4b] sm:$0x1]
  %v80 = vld [vmem:[%s0 + $0x4c] sm:$0x1]
  %v81 = vld [vmem:[%s0 + $0x4d] sm:$0x1]
  %v82 = vld [vmem:[%s0 + $0x4e] sm:$0x1]
  %v83 = vld [vmem:[%s0 + $0x4f] sm:$0x1]
  %v84 = vld [vmem:[%s0 + $0x50] sm:$0x1]
  %v85 = vld [vmem:[%s0 + $0x51] sm:$0x1]
  %v86 = vld [vmem:[%s0 + $0x52] sm:$0x1]
  %v87 = vld [vmem:[%s0 + $0x53] sm:$0x1]
  %v88 = vld [vmem:[%s0 + $0x54] sm:$0x1]
  %v89 = vld [vmem:[%s0 + $0x55] sm:$0x1]
  %v90 = vld [vmem:[%s0 + $0x56] sm:$0x1]
  %v91 = vld [vmem:[%s0 + $0x57] sm:$0x1]
  %v92 = vld [vmem:[%s0 + $0x58] sm:$0x1]
  %v93 = vld [vmem:[%s0 + $0x5a] sm:$0x1]
  %v94 = vld [vmem:[%s0 + $0x5b] sm:$0x1]
  %v95 = vld [vmem:[%s0 + $0x5c] sm:$0x1]
  %v96 = vld [vmem:[%s0 + $0x5d] sm:$0x1]
  %v97 = vld [vmem:[%s0 + $0x5e] sm:$0x1]
  %v98 = vld [vmem:[%s0 + $0x5f] sm:$0x1]
  %v99 = vld [vmem:[%s0 + $0x60] sm:$0x1]
  %v100 = vld [vmem:[%s0 + $0x61] sm:$0x1]
  %v101 = vld [vmem:[%s0 + $0x62] sm:$0x1]
  %v102 = vld [vmem:[%s0 + $0x63] sm:$0x1]
  %v103 = vld [vmem:[%s0 + $0x64] sm:$0x1]
  %v104 = vld [vmem:[%s0 + $0x65] sm:$0x1]
  %v105 = vld [vmem:[%s0 + $0x66] sm:$0x1]
  %v106 = vld [vmem:[%s0 + $0x67] sm:$0x1]
  %v107 = vld [vmem:[%s0 + $0x68] sm:$0x1]
  %v108 = vld [vmem:[%s0 + $0x69] sm:$0x1]
  %v109 = vld [vmem:[%s0 + $0x6a] sm:$0x1]
  %v110 = vld [vmem:[%s0 + $0x6c] sm:$0x1]
  %v111 = vld [vmem:[%s0 + $0x6d] sm:$0x1]
  %v112 = vld [vmem:[%s0 + $0x6e] sm:$0x1]
  %v113 = vld [vmem:[%s0 + $0x6f] sm:$0x1]
  %v114 = vld [vmem:[%s0 + $0x70] sm:$0x1]
  %v115 = vld [vmem:[%s0 + $0x71] sm:$0x1]
  %v116 = vld [vmem:[%s0 + $0x72] sm:$0x1]
  %v117 = vld [vmem:[%s0 + $0x73] sm:$0x1]
  %v118 = vld [vmem:[%s0 + $0x74] sm:$0x1]
  %v119 = vld [vmem:[%s0 + $0x75] sm:$0x1]
  %v120 = vld [vmem:[%s0 + $0x76] sm:$0x1]
  %v121 = vld [vmem:[%s0 + $0x77] sm:$0x1]
  %v122 = vld [vmem:[%s0 + $0x78] sm:$0x1]
  %v123 = vld [vmem:[%s0 + $0x79] sm:$0x1]
  %v124 = vld [vmem:[%s0 + $0x7a] sm:$0x1]
  %v125 = vld [vmem:[%s0 + $0x7b] sm:$0x1]
  %v126 = vld [vmem:[%s0 + $0x7c] sm:$0x1]
  %v127 = vld [vmem:[%s0 + $0x7e] sm:$0x1]
  %v128 = vld [vmem:[%s0 + $0x7f] sm:$0x1]
  %v129 = vld [vmem:[%s0 + $0x80] sm:$0x1]
  %v130 = vld [vmem:[%s0 + $0x81] sm:$0x1]
  %v131 = vld [vmem:[%s0 + $0x82] sm:$0x1]
  %v132 = vld [vmem:[%s0 + $0x83] sm:$0x1]
  %v133 = vld [vmem:[%s0 + $0x84] sm:$0x1]
  %v134 = vld [vmem:[%s0 + $0x85] sm:$0x1]
  %v135 = vld [vmem:[%s0 + $0x86] sm:$0x1]
  %v136 = vld [vmem:[%s0 + $0x87] sm:$0x1]
  %v137 = vld [vmem:[%s0 + $0x88] sm:$0x1]
  %v138 = vld [vmem:[%s0 + $0x89] sm:$0x1]
  %v139 = vld [vmem:[%s0 + $0x8a] sm:$0x1]
  %v140 = vld [vmem:[%s0 + $0x8b] sm:$0x1]
  %v141 = vld [vmem:[%s0 + $0x8c] sm:$0x1]
  %v142 = vld [vmem:[%s0 + $0x8d] sm:$0x1]
  %v143 = vld [vmem:[%s0 + $0x8e] sm:$0x1]
  %v144 = vld [vmem:[%s0 + $0x90] sm:$0x1]
  %v145 = vld [vmem:[%s0 + $0x91] sm:$0x1]
  %v146 = vld [vmem:[%s0 + $0x92] sm:$0x1]
  %v147 = vld [vmem:[%s0 + $0x93] sm:$0x1]
  %v148 = vld [vmem:[%s0 + $0x94] sm:$0x1]
  %v149 = vld [vmem:[%s0 + $0x95] sm:$0x1]
  %v150 = vld [vmem:[%s0 + $0x96] sm:$0x1]
  %v151 = vld [vmem:[%s0 + $0x97] sm:$0x1]
  %v152 = vld [vmem:[%s0 + $0x98] sm:$0x1]
  %v153 = vld [vmem:[%s0 + $0x99] sm:$0x1]
  %v154 = vld [vmem:[%s0 + $0x9a] sm:$0x1]
  %v155 = vld [vmem:[%s0 + $0x9b] sm:$0x1]
  %v156 = vld [vmem:[%s0 + $0x9c] sm:$0x1]
  %v157 = vld [vmem:[%s0 + $0x9d] sm:$0x1]
  %v158 = vld [vmem:[%s0 + $0x9e] sm:$0x1]
  %v159 = vld [vmem:[%s0 + $0x9f] sm:$0x1]
  %v160 = vld [vmem:[%s0 + $0xa0] sm:$0x1]
  %v161 = vld [vmem:[%s0 + $0xa2] sm:$0x1]
  %v162 = vld [vmem:[%s0 + $0xa3] sm:$0x1]
  %v163 = vld [vmem:[%s0 + $0xa4] sm:$0x1]
  %v164 = vld [vmem:[%s0 + $0xa5] sm:$0x1]
  %v165 = vld [vmem:[%s0 + $0xa6] sm:$0x1]
  %v166 = vld [vmem:[%s0 + $0xa7] sm:$0x1]
  %v167 = vld [vmem:[%s0 + $0xa8] sm:$0x1]
  %v168 = vld [vmem:[%s0 + $0xa9] sm:$0x1]
  %v169 = vld [vmem:[%s0 + $0xaa] sm:$0x1]
  %v170 = vld [vmem:[%s0 + $0xab] sm:$0x1]
  %v171 = vld [vmem:[%s0 + $0xac] sm:$0x1]
  %v172 = vld [vmem:[%s0 + $0xad] sm:$0x1]
  %v173 = vld [vmem:[%s0 + $0xae] sm:$0x1]
  %v174 = vld [vmem:[%s0 + $0xaf] sm:$0x1]
  %v175 = vld [vmem:[%s0 + $0xb0] sm:$0x1]
  %v176 = vld [vmem:[%s0 + $0xb1] sm:$0x1]
  %v177 = vld [vmem:[%s0 + $0xb2] sm:$0x1]
  %v178 = vld [vmem:[%s0 + $0xb4] sm:$0x1]
  %v179 = vld [vmem:[%s0 + $0xb5] sm:$0x1]
  %v180 = vld [vmem:[%s0 + $0xb6] sm:$0x1]
  %v181 = vld [vmem:[%s0 + $0xb7] sm:$0x1]
  %v182 = vld [vmem:[%s0 + $0xb8] sm:$0x1]
  %v183 = vld [vmem:[%s0 + $0xb9] sm:$0x1]
  %v184 = vld [vmem:[%s0 + $0xba] sm:$0x1]
  %v185 = vld [vmem:[%s0 + $0xbb] sm:$0x1]
  %v186 = vld [vmem:[%s0 + $0xbc] sm:$0x1]
  %v187 = vld [vmem:[%s0 + $0xbd] sm:$0x1]
  %v188 = vld [vmem:[%s0 + $0xbe] sm:$0x1]
  %v189 = vld [vmem:[%s0 + $0xbf] sm:$0x1]
  %v190 = vld [vmem:[%s0 + $0xc0] sm:$0x1]
  %v191 = vld [vmem:[%s0 + $0xc1] sm:$0x1]
  %v192 = vld [vmem:[%s0 + $0xc2] sm:$0x1]
  %v193 = vld [vmem:[%s0 + $0xc3] sm:$0x1]
  %v194 = vld [vmem:[%s0 + $0xc4] sm:$0x1]
  %v195 = vld [vmem:[%s0 + $0xc6] sm:$0x1]
  %v196 = vld [vmem:[%s0 + $0xc7] sm:$0x1]
  %v197 = vld [vmem:[%s0 + $0xc8] sm:$0x1]
  %v198 = vld [vmem:[%s0 + $0xc9] sm:$0x1]
  %v199 = vld [vmem:[%s0 + $0xca] sm:$0x1]
  %v200 = vld [vmem:[%s0 + $0xcb] sm:$0x1]
  %v201 = vld [vmem:[%s0 + $0xcc] sm:$0x1]
  %v202 = vld [vmem:[%s0 + $0xcd] sm:$0x1]
  %v203 = vld [vmem:[%s0 + $0xce] sm:$0x1]
  %v204 = vld [vmem:[%s0 + $0xcf] sm:$0x1]
  %v205 = vld [vmem:[%s0 + $0xd0] sm:$0x1]
  %v206 = vld [vmem:[%s0 + $0xd1] sm:$0x1]
  %v207 = vld [vmem:[%s0 + $0xd2] sm:$0x1]
  %v208 = vld [vmem:[%s0 + $0xd3] sm:$0x1]
  %v209 = vld [vmem:[%s0 + $0xd4] sm:$0x1]
  %v210 = vld [vmem:[%s0 + $0xd5] sm:$0x1]
  %v211 = vld [vmem:[%s0 + $0xd6] sm:$0x1]
  %v212 = vld [vmem:[%s0 + $0xd8] sm:$0x1]
  %v213 = vld [vmem:[%s0 + $0xd9] sm:$0x1]
  %v214 = vld [vmem:[%s0 + $0xda] sm:$0x1]
  %v215 = vld [vmem:[%s0 + $0xdb] sm:$0x1]
  %v216 = vld [vmem:[%s0 + $0xdc] sm:$0x1]
  %v217 = vld [vmem:[%s0 + $0xdd] sm:$0x1]
  %v218 = vld [vmem:[%s0 + $0xde] sm:$0x1]
  %v219 = vld [vmem:[%s0 + $0xdf] sm:$0x1]
  %v220 = vld [vmem:[%s0 + $0xe0] sm:$0x1]
  %v221 = vld [vmem:[%s0 + $0xe1] sm:$0x1]
  %v222 = vld [vmem:[%s0 + $0xe2] sm:$0x1]
  %v223 = vld [vmem:[%s0 + $0xe3] sm:$0x1]
  %v224 = vld [vmem:[%s0 + $0xe4] sm:$0x1]
  %v225 = vld [vmem:[%s0 + $0xe5] sm:$0x1]
  %v226 = vld [vmem:[%s0 + $0xe6] sm:$0x1]
  %v227 = vld [vmem:[%s0 + $0xe7] sm:$0x1]
  %v228 = vld [vmem:[%s0 + $0xe8] sm:$0x1]
  %v229 = vld [vmem:[%s0 + $0xea] sm:$0x1]
  %v230 = vld [vmem:[%s0 + $0xeb] sm:$0x1]
  %v231 = vld [vmem:[%s0 + $0xec] sm:$0x1]
  %v232 = vld [vmem:[%s0 + $0xed] sm:$0x1]
  %v233 = vld [vmem:[%s0 + $0xee] sm:$0x1]
  %v234 = vld [vmem:[%s0 + $0xef] sm:$0x1]
  %v235 = vld [vmem:[%s0 + $0xf0] sm:$0x1]
  %v236 = vld [vmem:[%s0 + $0xf1] sm:$0x1]
  %v237 = vld [vmem:[%s0 + $0xf2] sm:$0x1]
  %v238 = vld [vmem:[%s0 + $0xf3] sm:$0x1]
  %v239 = vld [vmem:[%s0 + $0xf4] sm:$0x1]
  %v240 = vld [vmem:[%s0 + $0xf5] sm:$0x1]
  %v241 = vld [vmem:[%s0 + $0xf6] sm:$0x1]
  %v242 = vld [vmem:[%s0 + $0xf7] sm:$0x1]
  %v243 = vld [vmem:[%s0 + $0xf8] sm:$0x1]
  %v244 = vld [vmem:[%s0 + $0xf9] sm:$0x1]
  %v245 = vld [vmem:[%s0 + $0xfa] sm:$0x1]
  %v246 = vld [vmem:[%s0 + $0xfc] sm:$0x1]
  %v247 = vld [vmem:[%s0 + $0xfd] sm:$0x1]
  %v248 = vld [vmem:[%s0 + $0xfe] sm:$0x1]
  %v249 = vld [vmem:[%s0 + $0xff] sm:$0x1]
  %v250 = vld [vmem:[%s0 + $0x100] sm:$0x1]
  %v251 = vld [vmem:[%s0 + $0x101] sm:$0x1]
  %v252 = vld [vmem:[%s0 + $0x102] sm:$0x1]
  %v253 = vld [vmem:[%s0 + $0x103] sm:$0x1]
  %v254 = vld [vmem:[%s0 + $0x104] sm:$0x1]
  %v255 = vld [vmem:[%s0 + $0x105] sm:$0x1]
  %v256 = vld [vmem:[%s0 + $0x106] sm:$0x1]
  %v257 = vld [vmem:[%s0 + $0x107] sm:$0x1]
  %v258 = vld [vmem:[%s0 + $0x108] sm:$0x1]
  %v259 = vld [vmem:[%s0 + $0x109] sm:$0x1]
  %v260 = vld [vmem:[%s0 + $0x10a] sm:$0x1]
  %v261 = vld [vmem:[%s0 + $0x10b] sm:$0x1]
  %v262 = vld [vmem:[%s0 + $0x10c] sm:$0x1]
  %v263 = vld [vmem:[%s0 + $0x10e] sm:$0x1]
  %v264 = vld [vmem:[%s0 + $0x10f] sm:$0x1]
  %v265 = vld [vmem:[%s0 + $0x110] sm:$0x1]
  %v266 = vld [vmem:[%s0 + $0x111] sm:$0x1]
  %v267 = vld [vmem:[%s0 + $0x112] sm:$0x1]
  %v268 = vld [vmem:[%s0 + $0x113] sm:$0x1]
  %v269 = vld [vmem:[%s0 + $0x114] sm:$0x1]
  %v270 = vld [vmem:[%s0 + $0x115] sm:$0x1]
  %v271 = vld [vmem:[%s0 + $0x116] sm:$0x1]
  %v272 = vld [vmem:[%s0 + $0x117] sm:$0x1]
  %v273 = vld [vmem:[%s0 + $0x118] sm:$0x1]
  %v274 = vld [vmem:[%s0 + $0x119] sm:$0x1]
  %v275 = vld [vmem:[%s0 + $0x11a] sm:$0x1]
  %v276 = vld [vmem:[%s0 + $0x11b] sm:$0x1]
  %v277 = vld [vmem:[%s0 + $0x11c] sm:$0x1]
  %v278 = vld [vmem:[%s0 + $0x11d] sm:$0x1]
  %v279 = vld [vmem:[%s0 + $0x11e] sm:$0x1]
  %v280 = vld [vmem:[%s0 + $0x120] sm:$0x1]
  %v281 = vld [vmem:[%s0 + $0x121] sm:$0x1]
  %v282 = vld [vmem:[%s0 + $0x122] sm:$0x1]
  %v283 = vld [vmem:[%s0 + $0x123] sm:$0x1]
  %v284 = vld [vmem:[%s0 + $0x124] sm:$0x1]
  %v285 = vld [vmem:[%s0 + $0x125] sm:$0x1]
  %v286 = vld [vmem:[%s0 + $0x126] sm:$0x1]
  %v287 = vld [vmem:[%s0 + $0x127] sm:$0x1]
  %v288 = vld [vmem:[%s0 + $0x128] sm:$0x1]
  %v289 = vld [vmem:[%s0 + $0x129] sm:$0x1]
  %v290 = vld [vmem:[%s0 + $0x12a] sm:$0x1]
  %v291 = vld [vmem:[%s0 + $0x12b] sm:$0x1]
  %v292 = vld [vmem:[%s0 + $0x12c] sm:$0x1]
  %v293 = vld [vmem:[%s0 + $0x12d] sm:$0x1]
  %v294 = vld [vmem:[%s0 + $0x12e] sm:$0x1]
  %v295 = vld [vmem:[%s0 + $0x12f] sm:$0x1]
  %v296 = vld [vmem:[%s0 + $0x130] sm:$0x1]
  %v297 = vmax.f32 %v8, %v25
  %v298 = vmax.f32 %v9, %v26
  %v299 = vmax.f32 %v10, %v27
  %v300 = vmax.f32 %v11, %v28
  %v301 = vmax.f32 %v12, %v29
  %v302 = vmax.f32 %v13, %v30
  %v303 = vmax.f32 %v14, %v31
  %v304 = vmax.f32 %v15, %v32
  %v305 = vmax.f32 %v16, %v33
  %v306 = vmax.f32 %v17, %v34
  %v307 = vmax.f32 %v18, %v35
  %v308 = vmax.f32 %v19, %v36
  %v309 = vmax.f32 %v20, %v37
  %v310 = vmax.f32 %v21, %v38
  %v311 = vmax.f32 %v22, %v39
  %v312 = vmax.f32 %v23, %v40
  %v313 = vmax.f32 %v24, %v41
  %v314 = vmax.f32 %v42, %v59
  %v315 = vmax.f32 %v43, %v60
  %v316 = vmax.f32 %v44, %v61
  %v317 = vmax.f32 %v45, %v62
  %v318 = vmax.f32 %v46, %v63
  %v319 = vmax.f32 %v47, %v64
  %v320 = vmax.f32 %v48, %v65
  %v321 = vmax.f32 %v49, %v66
  %v322 = vmax.f32 %v50, %v67
  %v323 = vmax.f32 %v51, %v68
  %v324 = vmax.f32 %v52, %v69
  %v325 = vmax.f32 %v53, %v70
  %v326 = vmax.f32 %v54, %v71
  %v327 = vmax.f32 %v55, %v72
  %v328 = vmax.f32 %v56, %v73
  %v329 = vmax.f32 %v57, %v74
  %v330 = vmax.f32 %v58, %v75
  %v331 = vmax.f32 %v76, %v93
  %v332 = vmax.f32 %v77, %v94
  %v333 = vmax.f32 %v78, %v95
  %v334 = vmax.f32 %v79, %v96
  %v335 = vmax.f32 %v80, %v97
  %v336 = vmax.f32 %v81, %v98
  %v337 = vmax.f32 %v82, %v99
  %v338 = vmax.f32 %v83, %v100
  %v339 = vmax.f32 %v84, %v101
  %v340 = vmax.f32 %v85, %v102
  %v341 = vmax.f32 %v86, %v103
  %v342 = vmax.f32 %v87, %v104
  %v343 = vmax.f32 %v88, %v105
  %v344 = vmax.f32 %v89, %v106
  %v345 = vmax.f32 %v90, %v107
  %v346 = vmax.f32 %v91, %v108
  %v347 = vmax.f32 %v92, %v109
  %v348 = vmax.f32 %v110, %v127
  %v349 = vmax.f32 %v111, %v128
  %v350 = vmax.f32 %v112, %v129
  %v351 = vmax.f32 %v113, %v130
  %v352 = vmax.f32 %v114, %v131
  %v353 = vmax.f32 %v115, %v132
  %v354 = vmax.f32 %v116, %v133
  %v355 = vmax.f32 %v117, %v134
  %v356 = vmax.f32 %v118, %v135
  %v357 = vmax.f32 %v119, %v136
  %v358 = vmax.f32 %v120, %v137
  %v359 = vmax.f32 %v121, %v138
  %v360 = vmax.f32 %v122, %v139
  %v361 = vmax.f32 %v123, %v140
  %v362 = vmax.f32 %v124, %v141
  %v363 = vmax.f32 %v125, %v142
  %v364 = vmax.f32 %v126, %v143
  %v365 = vmax.f32 %v144, %v161
  %v366 = vmax.f32 %v145, %v162
  %v367 = vmax.f32 %v146, %v163
  %v368 = vmax.f32 %v147, %v164
  %v369 = vmax.f32 %v148, %v165
  %v370 = vmax.f32 %v149, %v166
  %v371 = vmax.f32 %v150, %v167
  %v372 = vmax.f32 %v151, %v168
  %v373 = vmax.f32 %v152, %v169
  %v374 = vmax.f32 %v153, %v170
  %v375 = vmax.f32 %v154, %v171
  %v376 = vmax.f32 %v155, %v172
  %v377 = vmax.f32 %v156, %v173
  %v378 = vmax.f32 %v157, %v174
  %v379 = vmax.f32 %v158, %v175
  %v380 = vmax.f32 %v159, %v176
  %v381 = vmax.f32 %v160, %v177
  %v382 = vmax.f32 %v178, %v195
  %v383 = vmax.f32 %v179, %v196
  %v384 = vmax.f32 %v180, %v197
  %v385 = vmax.f32 %v181, %v198
  %v386 = vmax.f32 %v182, %v199
  %v387 = vmax.f32 %v183, %v200
  %v388 = vmax.f32 %v184, %v201
  %v389 = vmax.f32 %v185, %v202
  %v390 = vmax.f32 %v186, %v203
  %v391 = vmax.f32 %v187, %v204
  %v392 = vmax.f32 %v188, %v205
  %v393 = vmax.f32 %v189, %v206
  %v394 = vmax.f32 %v190, %v207
  %v395 = vmax.f32 %v191, %v208
  %v396 = vmax.f32 %v192, %v209
  %v397 = vmax.f32 %v193, %v210
  %v398 = vmax.f32 %v194, %v211
  %v399 = vmax.f32 %v212, %v229
  %v400 = vmax.f32 %v213, %v230
  %v401 = vmax.f32 %v214, %v231
  %v402 = vmax.f32 %v215, %v232
  %v403 = vmax.f32 %v216, %v233
  %v404 = vmax.f32 %v217, %v234
  %v405 = vmax.f32 %v218, %v235
  %v406 = vmax.f32 %v219, %v236
  %v407 = vmax.f32 %v220, %v237
  %v408 = vmax.f32 %v221, %v238
  %v409 = vmax.f32 %v222, %v239
  %v410 = vmax.f32 %v223, %v240
  %v411 = vmax.f32 %v224, %v241
  %v412 = vmax.f32 %v225, %v242
  %v413 = vmax.f32 %v226, %v243
  %v414 = vmax.f32 %v227, %v244
  %v415 = vmax.f32 %v228, %v245
  %v416 = vmax.f32 %v246, %v263
  %v417 = vmax.f32 %v247, %v264
  %v418 = vmax.f32 %v248, %v265
  %v419 = vmax.f32 %v249, %v266
  %v420 = vmax.f32 %v250, %v267
  %v421 = vmax.f32 %v251, %v268
  %v422 = vmax.f32 %v252, %v269
  %v423 = vmax.f32 %v253, %v270
  %v424 = vmax.f32 %v254, %v271
  %v425 = vmax.f32 %v255, %v272
  %v426 = vmax.f32 %v256, %v273
  %v427 = vmax.f32 %v257, %v274
  %v428 = vmax.f32 %v258, %v275
  %v429 = vmax.f32 %v259, %v276
  %v430 = vmax.f32 %v260, %v277
  %v431 = vmax.f32 %v261, %v278
  %v432 = vmax.f32 %v262, %v279
  %v433 = vmax.f32 %v297, %v42
  %v434 = vmax.f32 %v298, %v43
  %v435 = vmax.f32 %v299, %v44
  %v436 = vmax.f32 %v300, %v45
  %v437 = vmax.f32 %v301, %v46
  %v438 = vmax.f32 %v302, %v47
  %v439 = vmax.f32 %v303, %v48
  %v440 = vmax.f32 %v304, %v49
  %v441 = vmax.f32 %v305, %v50
  %v442 = vmax.f32 %v306, %v51
  %v443 = vmax.f32 %v307, %v52
  %v444 = vmax.f32 %v308, %v53
  %v445 = vmax.f32 %v309, %v54
  %v446 = vmax.f32 %v310, %v55
  %v447 = vmax.f32 %v311, %v56
  %v448 = vmax.f32 %v312, %v57
  %v449 = vmax.f32 %v313, %v58
  %v450 = vmax.f32 %v314, %v76
  %v451 = vmax.f32 %v315, %v77
  %v452 = vmax.f32 %v316, %v78
  %v453 = vmax.f32 %v317, %v79
  %v454 = vmax.f32 %v318, %v80
  %v455 = vmax.f32 %v319, %v81
  %v456 = vmax.f32 %v320, %v82
  %v457 = vmax.f32 %v321, %v83
  %v458 = vmax.f32 %v322, %v84
  %v459 = vmax.f32 %v323, %v85
  %v460 = vmax.f32 %v324, %v86
  %v461 = vmax.f32 %v325, %v87
  %v462 = vmax.f32 %v326, %v88
  %v463 = vmax.f32 %v327, %v89
  %v464 = vmax.f32 %v328, %v90
  %v465 = vmax.f32 %v329, %v91
  %v466 = vmax.f32 %v330, %v92
  %v467 = vmax.f32 %v331, %v110
  %v468 = vmax.f32 %v332, %v111
  %v469 = vmax.f32 %v333, %v112
  %v470 = vmax.f32 %v334, %v113
  %v471 = vmax.f32 %v335, %v114
  %v472 = vmax.f32 %v336, %v115
  %v473 = vmax.f32 %v337, %v116
  %v474 = vmax.f32 %v338, %v117
  %v475 = vmax.f32 %v339, %v118
  %v476 = vmax.f32 %v340, %v119
  %v477 = vmax.f32 %v341, %v120
  %v478 = vmax.f32 %v342, %v121
  %v479 = vmax.f32 %v343, %v122
  %v480 = vmax.f32 %v344, %v123
  %v481 = vmax.f32 %v345, %v124
  %v482 = vmax.f32 %v346, %v125
  %v483 = vmax.f32 %v347, %v126
  %v484 = vmax.f32 %v348, %v144
  %v485 = vmax.f32 %v349, %v145
  %v486 = vmax.f32 %v350, %v146
  %v487 = vmax.f32 %v351, %v147
  %v488 = vmax.f32 %v352, %v148
  %v489 = vmax.f32 %v353, %v149
  %v490 = vmax.f32 %v354, %v150
  %v491 = vmax.f32 %v355, %v151
  %v492 = vmax.f32 %v356, %v152
  %v493 = vmax.f32 %v357, %v153
  %v494 = vmax.f32 %v358, %v154
  %v495 = vmax.f32 %v359, %v155
  %v496 = vmax.f32 %v360, %v156
  %v497 = vmax.f32 %v361, %v157
  %v498 = vmax.f32 %v362, %v158
  %v499 = vmax.f32 %v363, %v159
  %v500 = vmax.f32 %v364, %v160
  %v501 = vmax.f32 %v365, %v178
  %v502 = vmax.f32 %v366, %v179
  %v503 = vmax.f32 %v367, %v180
  %v504 = vmax.f32 %v368, %v181
  %v505 = vmax.f32 %v369, %v182
  %v506 = vmax.f32 %v370, %v183
  %v507 = vmax.f32 %v371, %v184
  %v508 = vmax.f32 %v372, %v185
  %v509 = vmax.f32 %v373, %v186
  %v510 = vmax.f32 %v374, %v187
  %v511 = vmax.f32 %v375, %v188
  %v512 = vmax.f32 %v376, %v189
  %v513 = vmax.f32 %v377, %v190
  %v514 = vmax.f32 %v378, %v191
  %v515 = vmax.f32 %v379, %v192
  %v516 = vmax.f32 %v380, %v193
  %v517 = vmax.f32 %v381, %v194
  %v518 = vmax.f32 %v382, %v212
  %v519 = vmax.f32 %v383, %v213
  %v520 = vmax.f32 %v384, %v214
  %v521 = vmax.f32 %v385, %v215
  %v522 = vmax.f32 %v386, %v216
  %v523 = vmax.f32 %v387, %v217
  %v524 = vmax.f32 %v388, %v218
  %v525 = vmax.f32 %v389, %v219
  %v526 = vmax.f32 %v390, %v220
  %v527 = vmax.f32 %v391, %v221
  %v528 = vmax.f32 %v392, %v222
  %v529 = vmax.f32 %v393, %v223
  %v530 = vmax.f32 %v394, %v224
  %v531 = vmax.f32 %v395, %v225
  %v532 = vmax.f32 %v396, %v226
  %v533 = vmax.f32 %v397, %v227
  %v534 = vmax.f32 %v398, %v228
  %v535 = vmax.f32 %v399, %v246
  %v536 = vmax.f32 %v400, %v247
  %v537 = vmax.f32 %v401, %v248
  %v538 = vmax.f32 %v402, %v249
  %v539 = vmax.f32 %v403, %v250
  %v540 = vmax.f32 %v404, %v251
  %v541 = vmax.f32 %v405, %v252
  %v542 = vmax.f32 %v406, %v253
  %v543 = vmax.f32 %v407, %v254
  %v544 = vmax.f32 %v408, %v255
  %v545 = vmax.f32 %v409, %v256
  %v546 = vmax.f32 %v410, %v257
  %v547 = vmax.f32 %v411, %v258
  %v548 = vmax.f32 %v412, %v259
  %v549 = vmax.f32 %v413, %v260
  %v550 = vmax.f32 %v414, %v261
  %v551 = vmax.f32 %v415, %v262
  %v552 = vmax.f32 %v416, %v280
  %v553 = vmax.f32 %v417, %v281
  %v554 = vmax.f32 %v418, %v282
  %v555 = vmax.f32 %v419, %v283
  %v556 = vmax.f32 %v420, %v284
  %v557 = vmax.f32 %v421, %v285
  %v558 = vmax.f32 %v422, %v286
  %v559 = vmax.f32 %v423, %v287
  %v560 = vmax.f32 %v424, %v288
  %v561 = vmax.f32 %v425, %v289
  %v562 = vmax.f32 %v426, %v290
  %v563 = vmax.f32 %v427, %v291
  %v564 = vmax.f32 %v428, %v292
  %v565 = vmax.f32 %v429, %v293
  %v566 = vmax.f32 %v430, %v294
  %v567 = vmax.f32 %v431, %v295
  %v568 = vmax.f32 %v432, %v296
  %v569 = vmax.f32 %v433, %v434
  %v570 = vmax.f32 %v435, %v436
  %v571 = vmax.f32 %v437, %v438
  %v572 = vmax.f32 %v439, %v440
  %v573 = vmax.f32 %v441, %v442
  %v574 = vmax.f32 %v443, %v444
  %v575 = vmax.f32 %v445, %v446
  %v576 = vmax.f32 %v447, %v448
  %v577 = vmax.f32 %v450, %v451
  %v578 = vmax.f32 %v452, %v453
  %v579 = vmax.f32 %v454, %v455
  %v580 = vmax.f32 %v456, %v457
  %v581 = vmax.f32 %v458, %v459
  %v582 = vmax.f32 %v460, %v461
  %v583 = vmax.f32 %v462, %v463
  %v584 = vmax.f32 %v464, %v465
  %v585 = vmax.f32 %v467, %v468
  %v586 = vmax.f32 %v469, %v470
  %v587 = vmax.f32 %v471, %v472
  %v588 = vmax.f32 %v473, %v474
  %v589 = vmax.f32 %v475, %v476
  %v590 = vmax.f32 %v477, %v478
  %v591 = vmax.f32 %v479, %v480
  %v592 = vmax.f32 %v481, %v482
  %v593 = vmax.f32 %v484, %v485
  %v594 = vmax.f32 %v486, %v487
  %v595 = vmax.f32 %v488, %v489
  %v596 = vmax.f32 %v490, %v491
  %v597 = vmax.f32 %v492, %v493
  %v598 = vmax.f32 %v494, %v495
  %v599 = vmax.f32 %v496, %v497
  %v600 = vmax.f32 %v498, %v499
  %v601 = vmax.f32 %v501, %v502
  %v602 = vmax.f32 %v503, %v504
  %v603 = vmax.f32 %v505, %v506
  %v604 = vmax.f32 %v507, %v508
  %v605 = vmax.f32 %v509, %v510
  %v606 = vmax.f32 %v511, %v512
  %v607 = vmax.f32 %v513, %v514
  %v608 = vmax.f32 %v515, %v516
  %v609 = vmax.f32 %v518, %v519
  %v610 = vmax.f32 %v520, %v521
  %v611 = vmax.f32 %v522, %v523
  %v612 = vmax.f32 %v524, %v525
  %v613 = vmax.f32 %v526, %v527
  %v614 = vmax.f32 %v528, %v529
  %v615 = vmax.f32 %v530, %v531
  %v616 = vmax.f32 %v532, %v533
  %v617 = vmax.f32 %v535, %v536
  %v618 = vmax.f32 %v537, %v538
  %v619 = vmax.f32 %v539, %v540
  %v620 = vmax.f32 %v541, %v542
  %v621 = vmax.f32 %v543, %v544
  %v622 = vmax.f32 %v545, %v546
  %v623 = vmax.f32 %v547, %v548
  %v624 = vmax.f32 %v549, %v550
  %v625 = vmax.f32 %v552, %v553
  %v626 = vmax.f32 %v554, %v555
  %v627 = vmax.f32 %v556, %v557
  %v628 = vmax.f32 %v558, %v559
  %v629 = vmax.f32 %v560, %v561
  %v630 = vmax.f32 %v562, %v563
  %v631 = vmax.f32 %v564, %v565
  %v632 = vmax.f32 %v566, %v567
  %v633 = vmax.f32 %v569, %v435
  %v634 = vmax.f32 %v570, %v437
  %v635 = vmax.f32 %v571, %v439
  %v636 = vmax.f32 %v572, %v441
  %v637 = vmax.f32 %v573, %v443
  %v638 = vmax.f32 %v574, %v445
  %v639 = vmax.f32 %v575, %v447
  %v640 = vmax.f32 %v576, %v449
  %v641 = vmax.f32 %v577, %v452
  %v642 = vmax.f32 %v578, %v454
  %v643 = vmax.f32 %v579, %v456
  %v644 = vmax.f32 %v580, %v458
  %v645 = vmax.f32 %v581, %v460
  %v646 = vmax.f32 %v582, %v462
  %v647 = vmax.f32 %v583, %v464
  %v648 = vmax.f32 %v584, %v466
  %v649 = vmax.f32 %v585, %v469
  %v650 = vmax.f32 %v586, %v471
  %v651 = vmax.f32 %v587, %v473
  %v652 = vmax.f32 %v588, %v475
  %v653 = vmax.f32 %v589, %v477
  %v654 = vmax.f32 %v590, %v479
  %v655 = vmax.f32 %v591, %v481
  %v656 = vmax.f32 %v592, %v483
  %v657 = vmax.f32 %v593, %v486
  %v658 = vmax.f32 %v594, %v488
  %v659 = vmax.f32 %v595, %v490
  %v660 = vmax.f32 %v596, %v492
  %v661 = vmax.f32 %v597, %v494
  %v662 = vmax.f32 %v598, %v496
  %v663 = vmax.f32 %v599, %v498
  %v664 = vmax.f32 %v600, %v500
  %v665 = vmax.f32 %v601, %v503
  %v666 = vmax.f32 %v602, %v505
  %v667 = vmax.f32 %v603, %v507
  %v668 = vmax.f32 %v604, %v509
  %v669 = vmax.f32 %v605, %v511
  %v670 = vmax.f32 %v606, %v513
  %v671 = vmax.f32 %v607, %v515
  %v672 = vmax.f32 %v608, %v517
  %v673 = vmax.f32 %v609, %v520
  %v674 = vmax.f32 %v610, %v522
  %v675 = vmax.f32 %v611, %v524
  %v676 = vmax.f32 %v612, %v526
  %v677 = vmax.f32 %v613, %v528
  %v678 = vmax.f32 %v614, %v530
  %v679 = vmax.f32 %v615, %v532
  %v680 = vmax.f32 %v616, %v534
  %v681 = vmax.f32 %v617, %v537
  %v682 = vmax.f32 %v618, %v539
  %v683 = vmax.f32 %v619, %v541
  %v684 = vmax.f32 %v620, %v543
  %v685 = vmax.f32 %v621, %v545
  %v686 = vmax.f32 %v622, %v547
  %v687 = vmax.f32 %v623, %v549
  %v688 = vmax.f32 %v624, %v551
  %v689 = vmax.f32 %v625, %v554
  %v690 = vmax.f32 %v626, %v556
  %v691 = vmax.f32 %v627, %v558
  %v692 = vmax.f32 %v628, %v560
  %v693 = vmax.f32 %v629, %v562
  %v694 = vmax.f32 %v630, %v564
  %v695 = vmax.f32 %v631, %v566
  %v696 = vmax.f32 %v632, %v568
  %697 = vst [vmem:[%s1] sm:$0x1] %v633
  %698 = vst [vmem:[%s1 + $0x1] sm:$0x1] %v634
  %699 = vst [vmem:[%s1 + $0x2] sm:$0x1] %v635
  %700 = vst [vmem:[%s1 + $0x3] sm:$0x1] %v636
  %701 = vst [vmem:[%s1 + $0x4] sm:$0x1] %v637
  %702 = vst [vmem:[%s1 + $0x5] sm:$0x1] %v638
  %703 = vst [vmem:[%s1 + $0x6] sm:$0x1] %v639
  %704 = vst [vmem:[%s1 + $0x7] sm:$0x1] %v640
  %705 = vst [vmem:[%s1 + $0x8] sm:$0x1] %v641
  %706 = vst [vmem:[%s1 + $0x9] sm:$0x1] %v642
  %707 = vst [vmem:[%s1 + $0xa] sm:$0x1] %v643
  %708 = vst [vmem:[%s1 + $0xb] sm:$0x1] %v644
  %709 = vst [vmem:[%s1 + $0xc] sm:$0x1] %v645
  %710 = vst [vmem:[%s1 + $0xd] sm:$0x1] %v646
  %711 = vst [vmem:[%s1 + $0xe] sm:$0x1] %v647
  %712 = vst [vmem:[%s1 + $0xf] sm:$0x1] %v648
  %713 = vst [vmem:[%s1 + $0x10] sm:$0x1] %v649
  %714 = vst [vmem:[%s1 + $0x11] sm:$0x1] %v650
  %715 = vst [vmem:[%s1 + $0x12] sm:$0x1] %v651
  %716 = vst [vmem:[%s1 + $0x13] sm:$0x1] %v652
  %717 = vst [vmem:[%s1 + $0x14] sm:$0x1] %v653
  %718 = vst [vmem:[%s1 + $0x15] sm:$0x1] %v654
  %719 = vst [vmem:[%s1 + $0x16] sm:$0x1] %v655
  %720 = vst [vmem:[%s1 + $0x17] sm:$0x1] %v656
  %721 = vst [vmem:[%s1 + $0x18] sm:$0x1] %v657
  %722 = vst [vmem:[%s1 + $0x19] sm:$0x1] %v658
  %723 = vst [vmem:[%s1 + $0x1a] sm:$0x1] %v659
  %724 = vst [vmem:[%s1 + $0x1b] sm:$0x1] %v660
  %725 = vst [vmem:[%s1 + $0x1c] sm:$0x1] %v661
  %726 = vst [vmem:[%s1 + $0x1d] sm:$0x1] %v662
  %727 = vst [vmem:[%s1 + $0x1e] sm:$0x1] %v663
  %728 = vst [vmem:[%s1 + $0x1f] sm:$0x1] %v664
  %729 = vst [vmem:[%s1 + $0x20] sm:$0x1] %v665
  %730 = vst [vmem:[%s1 + $0x21] sm:$0x1] %v666
  %731 = vst [vmem:[%s1 + $0x22] sm:$0x1] %v667
  %732 = vst [vmem:[%s1 + $0x23] sm:$0x1] %v668
  %733 = vst [vmem:[%s1 + $0x24] sm:$0x1] %v669
  %734 = vst [vmem:[%s1 + $0x25] sm:$0x1] %v670
  %735 = vst [vmem:[%s1 + $0x26] sm:$0x1] %v671
  %736 = vst [vmem:[%s1 + $0x27] sm:$0x1] %v672
  %737 = vst [vmem:[%s1 + $0x28] sm:$0x1] %v673
  %738 = vst [vmem:[%s1 + $0x29] sm:$0x1] %v674
  %739 = vst [vmem:[%s1 + $0x2a] sm:$0x1] %v675
  %740 = vst [vmem:[%s1 + $0x2b] sm:$0x1] %v676
  %741 = vst [vmem:[%s1 + $0x2c] sm:$0x1] %v677
  %742 = vst [vmem:[%s1 + $0x2d] sm:$0x1] %v678
  %743 = vst [vmem:[%s1 + $0x2e] sm:$0x1] %v679
  %744 = vst [vmem:[%s1 + $0x2f] sm:$0x1] %v680
  %745 = vst [vmem:[%s1 + $0x30] sm:$0x1] %v681
  %746 = vst [vmem:[%s1 + $0x31] sm:$0x1] %v682
  %747 = vst [vmem:[%s1 + $0x32] sm:$0x1] %v683
  %748 = vst [vmem:[%s1 + $0x33] sm:$0x1] %v684
  %749 = vst [vmem:[%s1 + $0x34] sm:$0x1] %v685
  %750 = vst [vmem:[%s1 + $0x35] sm:$0x1] %v686
  %751 = vst [vmem:[%s1 + $0x36] sm:$0x1] %v687
  %752 = vst [vmem:[%s1 + $0x37] sm:$0x1] %v688
  %753 = vst [vmem:[%s1 + $0x38] sm:$0x1] %v689
  %754 = vst [vmem:[%s1 + $0x39] sm:$0x1] %v690
  %755 = vst [vmem:[%s1 + $0x3a] sm:$0x1] %v691
  %756 = vst [vmem:[%s1 + $0x3b] sm:$0x1] %v692
  %757 = vst [vmem:[%s1 + $0x3c] sm:$0x1] %v693
  %758 = vst [vmem:[%s1 + $0x3d] sm:$0x1] %v694
  %759 = vst [vmem:[%s1 + $0x3e] sm:$0x1] %v695
  %760 = vst [vmem:[%s1 + $0x3f] sm:$0x1] %v696
  // Predicated region
  $region6: #{maxpool2d_pallas.1} parent=0 // pred_check
    _
  $region7: #{maxpool2d_pallas.1} parent=0 // pred_check_branch
    %762 = sbr.rel (0) target = $region9
  $region8: #{maxpool2d_pallas.1} parent=0 // pred_region
    _
  $region9: #{maxpool2d_pallas.1} parent=0 // pred_fallthru
    _
  // Predicated region
  $region10: #{maxpool2d_pallas.1} parent=0 // pred_check
    _
  $region11: #{maxpool2d_pallas.1} parent=0 // pred_check_branch
    %764 = sbr.rel (0) target = $region13
  $region12: #{maxpool2d_pallas.1} parent=0 // pred_region
    _
  $region13: #{maxpool2d_pallas.1} parent=0 // pred_fallthru
    _

</llo_original>
